<compile_context>
chip_gen: v5e
topology: v5e:2x2
jax: 0.10.0
libtpu: 0.0.40
codegen_flags: <defaults>
</compile_context>

<pallas_src>
import functools

import jax
import jax.numpy as jnp
from jax.experimental import pallas as pl
from jax.experimental.pallas import tpu as pltpu

_LANE = 128      # lane width (last-dim granularity)
_SUBLANE = 8     # sublane granularity (second-to-last dim)


def _round_up(x, m):
    return (x + m - 1) // m * m


def _softplus(x):
    # Matches torch.nn.Softplus(beta=1, threshold=20):
    #   x            if x > 20
    #   log(1+e^x)   otherwise (computed stably)
    return jnp.where(x > 20.0, x, jnp.log1p(jnp.exp(jnp.minimum(x, 20.0))))


def mlp_kernel(x_ref,
               w1_ref, b1_ref,
               w2_ref, b2_ref,
               w3_ref, b3_ref,
               w4_ref, b4_ref,
               o_ref):
    mm_dtype = w1_ref.dtype          # matmul input dtype (bf16 by default)

    x = x_ref[...]                                                            # (tb, c_in)

    # Layer 1: Linear -> ReLU (dropout = identity at inference)
    h = jnp.dot(x, w1_ref[...], preferred_element_type=jnp.float32) + b1_ref[...]
    h = jnp.maximum(h, 0.0).astype(mm_dtype)

    # Layer 2: Linear -> ReLU (dropout = identity at inference)
    h = jnp.dot(h, w2_ref[...], preferred_element_type=jnp.float32) + b2_ref[...]
    h = jnp.maximum(h, 0.0).astype(mm_dtype)

    # Layer 3: Linear -> ReLU
    h = jnp.dot(h, w3_ref[...], preferred_element_type=jnp.float32) + b3_ref[...]
    h = jnp.maximum(h, 0.0).astype(mm_dtype)

    # Layer 4: Linear -> Softplus (f32 epilogue, lane-dense store)
    z = jnp.dot(h, w4_ref[...], preferred_element_type=jnp.float32) + b4_ref[...]
    o_ref[...] = _softplus(z).astype(o_ref.dtype)


@functools.partial(jax.jit, static_argnames=("block_b", "matmul_dtype"))
def msci_forward(x, params, *, block_b=512, matmul_dtype=jnp.bfloat16):
    """Fused MLP forward.  x: [B, C_in] float32 -> [B, C_out] float32."""
    B, c_in = x.shape
    w1, b1, w2, b2, w3, b3, w4, b4 = params
    h1, h2, h3 = w1.shape[1], w2.shape[1], w3.shape[1]
    c_out = w4.shape[1]

    # ---- padding ------------------------------------------------------------
    # Output feature dim -> lane-dense (128) store.  Input feature dim is left
    # unpadded (block last dim == full array dim is legal; K=32 is fine for MXU).
    c_out_p = _round_up(c_out, _LANE)
    # Shrink the batch tile for tiny batches (whole batch in one grid step),
    # otherwise 512 rows/step (full MXU M-tiles; intermediates ~2 MB, VMEM-safe
    # on all generations including v7x's 64 MiB).
    tb = max(_SUBLANE, min(block_b, _round_up(B, _SUBLANE)))
    B_p = _round_up(B, tb)

    if B_p == B:
        xp = x.astype(matmul_dtype)
    else:
        xp = jnp.zeros((B_p, c_in), x.dtype).at[:B, :].set(x).astype(matmul_dtype)

    w1c = w1.astype(matmul_dtype)
    w2c = w2.astype(matmul_dtype)
    w3c = w3.astype(matmul_dtype)
    w4p = jnp.zeros((w4.shape[0], c_out_p), jnp.float32).at[:, :c_out].set(w4).astype(matmul_dtype)
    b4p = jnp.zeros((1, c_out_p), jnp.float32).at[:, :c_out].set(b4)
    # Biases stay f32 (bias add / ReLU / softplus run in f32 on the VPU/EUP).

    grid = (B_p // tb,)

    def resident(shape):
        # Constant block index across the grid -> the pipeline revisit-caches the
        # block (no per-step re-DMA); extra double buffer is ~0.5 MB, negligible.
        return pl.BlockSpec(shape, lambda i: (0, 0))

    itemsize = jnp.dtype(matmul_dtype).itemsize
    cost = pl.CostEstimate(
        flops=2 * B_p * (c_in * h1 + h1 * h2 + h2 * h3 + h3 * c_out_p),
        transcendentals=B_p * c_out_p,
        bytes_accessed=(B_p * c_in * itemsize                       # x read
                        + (c_in * h1 + h1 * h2 + h2 * h3 + h3 * c_out_p) * itemsize
                        + B_p * c_out_p * 4),                       # out write (f32)
    )

    out = pl.pallas_call(
        mlp_kernel,
        out_shape=jax.ShapeDtypeStruct((B_p, c_out_p), jnp.float32),
        grid_spec=pltpu.PrefetchScalarGridSpec(
            num_scalar_prefetch=0,
            grid=grid,
            in_specs=[
                pl.BlockSpec((tb, c_in), lambda i: (i, 0)),        # x batch tile
                resident(w1c.shape), resident(b1.shape),
                resident(w2c.shape), resident(b2.shape),
                resident(w3c.shape), resident(b3.shape),
                resident(w4p.shape), resident(b4p.shape),
            ],
            out_specs=pl.BlockSpec((tb, c_out_p), lambda i: (i, 0)),
        ),
        compiler_params=pltpu.CompilerParams(
            dimension_semantics=("parallel",)),
        cost_estimate=cost,
    )(xp, w1c, b1, w2c, b2, w3c, b3, w4p, b4p)

    return out[:B, :c_out]


def init_params(key, input_channel, output_channel):
    """Deterministic init mimicking PyTorch Linear default (U[-1/sqrt(fan_in), 1/sqrt(fan_in)]).
    Weights are stored [C_in, C_out] (PyTorch weight.T) so the kernel does x @ W + b."""
    dims = [(input_channel, 512), (512, 256), (256, 128), (128, output_channel)]
    params = []
    for (fan_in, fan_out) in dims:
        key, kw, kb = jax.random.split(key, 3)
        bound = 1.0 / jnp.sqrt(jnp.float32(fan_in))
        w = jax.random.uniform(kw, (fan_in, fan_out), jnp.float32, -bound, bound)
        b = jax.random.uniform(kb, (1, fan_out), jnp.float32, -bound, bound)
        params.extend([w, b])
    return tuple(params)


def reference_forward(x, params):
    """Plain-JAX f32 reference of the same forward pass (inference mode)."""
    w1, b1, w2, b2, w3, b3, w4, b4 = params
    h = jnp.maximum(x @ w1 + b1, 0.0)
    h = jnp.maximum(h @ w2 + b2, 0.0)
    h = jnp.maximum(h @ w3 + b3, 0.0)
    z = h @ w4 + b4
    return jnp.where(z > 20.0, z, jnp.log1p(jnp.exp(jnp.minimum(z, 20.0))))


if __name__ == "__main__":
    key = jax.random.PRNGKey(0)
    k_in, k_param = jax.random.split(key)

    B = 16                 # batch
    input_channel = 32
    output_channel = 8

    x = jax.random.normal(k_in, (B, input_channel), dtype=jnp.float32)
    params = init_params(k_param, input_channel, output_channel)

    out = msci_forward(x, params)
    out = jax.block_until_ready(out)

    ref = reference_forward(x, params)
    assert out.shape == (B, output_channel)
    max_err = jnp.max(jnp.abs(out - ref))
    # bf16 matmul inputs (f32 accumulation) -> loosened tolerance vs. f32 reference.
    assert jnp.allclose(out, ref, atol=5e-2, rtol=5e-2), f"mismatch vs reference (max abs err {max_err})"

    print("KERNEL_OK")
</pallas_src>

<mosaic_0001>
module attributes {stable_mosaic.version = 11 : i64} {
  func.func @mlp_kernel(%arg0: i32, %arg1: memref<16x32xbf16, #tpu.memory_space<vmem>>, %arg2: memref<32x512xbf16, #tpu.memory_space<vmem>>, %arg3: memref<1x512xf32, #tpu.memory_space<vmem>>, %arg4: memref<512x256xbf16, #tpu.memory_space<vmem>>, %arg5: memref<1x256xf32, #tpu.memory_space<vmem>>, %arg6: memref<256x128xbf16, #tpu.memory_space<vmem>>, %arg7: memref<1x128xf32, #tpu.memory_space<vmem>>, %arg8: memref<128x128xbf16, #tpu.memory_space<vmem>>, %arg9: memref<1x128xf32, #tpu.memory_space<vmem>>, %arg10: memref<16x128xf32, #tpu.memory_space<vmem>>) attributes {dimension_semantics = [#tpu.dimension_semantics<parallel>], iteration_bounds = array<i64: 1>, scalar_prefetch = 0 : i64, scratch_operands = 0 : i64, tpu.core_type = #tpu.core_type<tc>, window_params = [{transform_indices = @transform_0, window_bounds = array<i64: 16, 32>}, {pipeline_mode = #tpu.pipeline_mode<synchronous>, transform_indices = @transform_1, window_bounds = array<i64: 32, 512>}, {pipeline_mode = #tpu.pipeline_mode<synchronous>, transform_indices = @transform_2, window_bounds = array<i64: 1, 512>}, {pipeline_mode = #tpu.pipeline_mode<synchronous>, transform_indices = @transform_3, window_bounds = array<i64: 512, 256>}, {pipeline_mode = #tpu.pipeline_mode<synchronous>, transform_indices = @transform_4, window_bounds = array<i64: 1, 256>}, {pipeline_mode = #tpu.pipeline_mode<synchronous>, transform_indices = @transform_5, window_bounds = array<i64: 256, 128>}, {pipeline_mode = #tpu.pipeline_mode<synchronous>, transform_indices = @transform_6, window_bounds = array<i64: 1, 128>}, {pipeline_mode = #tpu.pipeline_mode<synchronous>, transform_indices = @transform_7, window_bounds = array<i64: 128, 128>}, {pipeline_mode = #tpu.pipeline_mode<synchronous>, transform_indices = @transform_8, window_bounds = array<i64: 1, 128>}, {transform_indices = @transform_9, window_bounds = array<i64: 16, 128>}]} {
    %c0 = arith.constant 0 : index
    %c0_0 = arith.constant 0 : index
    %0 = vector.load %arg1[%c0, %c0_0] : memref<16x32xbf16, #tpu.memory_space<vmem>>, vector<16x32xbf16>
    %c0_1 = arith.constant 0 : index
    %c0_2 = arith.constant 0 : index
    %1 = vector.load %arg2[%c0_1, %c0_2] : memref<32x512xbf16, #tpu.memory_space<vmem>>, vector<32x512xbf16>
    %cst = arith.constant dense<0.000000e+00> : vector<16x512xf32>
    %2 = tpu.matmul %0, %1, %cst {dimension_numbers = #tpu.dot_dimension_numbers<[1], [0], [0], [1], [0, 0, 1, 1], [], []>} : vector<16x32xbf16>, vector<32x512xbf16>, vector<16x512xf32> -> vector<16x512xf32>
    %c0_3 = arith.constant 0 : index
    %c0_4 = arith.constant 0 : index
    %3 = vector.load %arg3[%c0_3, %c0_4] : memref<1x512xf32, #tpu.memory_space<vmem>>, vector<1x512xf32>
    %4 = vector.broadcast %3 : vector<1x512xf32> to vector<16x512xf32>
    %5 = arith.addf %2, %4 : vector<16x512xf32>
    %cst_5 = arith.constant 0.000000e+00 : f32
    %6 = vector.broadcast %cst_5 : f32 to vector<16x512xf32>
    %7 = arith.maximumf %5, %6 : vector<16x512xf32>
    %8 = arith.truncf %7 : vector<16x512xf32> to vector<16x512xbf16>
    %c0_6 = arith.constant 0 : index
    %c0_7 = arith.constant 0 : index
    %9 = vector.load %arg4[%c0_6, %c0_7] : memref<512x256xbf16, #tpu.memory_space<vmem>>, vector<512x256xbf16>
    %cst_8 = arith.constant dense<0.000000e+00> : vector<16x256xf32>
    %10 = tpu.matmul %8, %9, %cst_8 {dimension_numbers = #tpu.dot_dimension_numbers<[1], [0], [0], [1], [0, 0, 1, 1], [], []>} : vector<16x512xbf16>, vector<512x256xbf16>, vector<16x256xf32> -> vector<16x256xf32>
    %c0_9 = arith.constant 0 : index
    %c0_10 = arith.constant 0 : index
    %11 = vector.load %arg5[%c0_9, %c0_10] : memref<1x256xf32, #tpu.memory_space<vmem>>, vector<1x256xf32>
    %12 = vector.broadcast %11 : vector<1x256xf32> to vector<16x256xf32>
    %13 = arith.addf %10, %12 : vector<16x256xf32>
    %cst_11 = arith.constant 0.000000e+00 : f32
    %14 = vector.broadcast %cst_11 : f32 to vector<16x256xf32>
    %15 = arith.maximumf %13, %14 : vector<16x256xf32>
    %16 = arith.truncf %15 : vector<16x256xf32> to vector<16x256xbf16>
    %c0_12 = arith.constant 0 : index
    %c0_13 = arith.constant 0 : index
    %17 = vector.load %arg6[%c0_12, %c0_13] : memref<256x128xbf16, #tpu.memory_space<vmem>>, vector<256x128xbf16>
    %cst_14 = arith.constant dense<0.000000e+00> : vector<16x128xf32>
    %18 = tpu.matmul %16, %17, %cst_14 {dimension_numbers = #tpu.dot_dimension_numbers<[1], [0], [0], [1], [0, 0, 1, 1], [], []>} : vector<16x256xbf16>, vector<256x128xbf16>, vector<16x128xf32> -> vector<16x128xf32>
    %c0_15 = arith.constant 0 : index
    %c0_16 = arith.constant 0 : index
    %19 = vector.load %arg7[%c0_15, %c0_16] : memref<1x128xf32, #tpu.memory_space<vmem>>, vector<1x128xf32>
    %20 = vector.broadcast %19 : vector<1x128xf32> to vector<16x128xf32>
    %21 = arith.addf %18, %20 : vector<16x128xf32>
    %cst_17 = arith.constant 0.000000e+00 : f32
    %22 = vector.broadcast %cst_17 : f32 to vector<16x128xf32>
    %23 = arith.maximumf %21, %22 : vector<16x128xf32>
    %24 = arith.truncf %23 : vector<16x128xf32> to vector<16x128xbf16>
    %c0_18 = arith.constant 0 : index
    %c0_19 = arith.constant 0 : index
    %25 = vector.load %arg8[%c0_18, %c0_19] : memref<128x128xbf16, #tpu.memory_space<vmem>>, vector<128x128xbf16>
    %cst_20 = arith.constant dense<0.000000e+00> : vector<16x128xf32>
    %26 = tpu.matmul %24, %25, %cst_20 {dimension_numbers = #tpu.dot_dimension_numbers<[1], [0], [0], [1], [0, 0, 1, 1], [], []>} : vector<16x128xbf16>, vector<128x128xbf16>, vector<16x128xf32> -> vector<16x128xf32>
    %c0_21 = arith.constant 0 : index
    %c0_22 = arith.constant 0 : index
    %27 = vector.load %arg9[%c0_21, %c0_22] : memref<1x128xf32, #tpu.memory_space<vmem>>, vector<1x128xf32>
    %28 = vector.broadcast %27 : vector<1x128xf32> to vector<16x128xf32>
    %29 = arith.addf %26, %28 : vector<16x128xf32>
    %cst_23 = arith.constant 2.000000e+01 : f32
    %30 = vector.broadcast %cst_23 : f32 to vector<16x128xf32>
    %31 = arith.cmpf ogt, %29, %30 : vector<16x128xf32>
    %cst_24 = arith.constant 2.000000e+01 : f32
    %32 = vector.broadcast %cst_24 : f32 to vector<16x128xf32>
    %33 = arith.minimumf %29, %32 : vector<16x128xf32>
    %34 = math.exp %33 : vector<16x128xf32>
    %35 = math.log1p %34 : vector<16x128xf32>
    %36 = arith.select %31, %29, %35 : vector<16x128xi1>, vector<16x128xf32>
    %c0_25 = arith.constant 0 : index
    %c0_26 = arith.constant 0 : index
    %37 = vector.load %arg10[%c0_25, %c0_26] : memref<16x128xf32, #tpu.memory_space<vmem>>, vector<16x128xf32>
    tpu.vector_store %arg10[%c0_25, %c0_26], %36 {strides = array<i32>} : memref<16x128xf32, #tpu.memory_space<vmem>>, vector<16x128xf32>,
    return
  }
  func.func @transform_0(%arg0: i32) -> (i32, i32) {
    %c0_i32 = arith.constant 0 : i32
    %c0_i32_0 = arith.constant 0 : i32
    return %arg0, %c0_i32 : i32, i32
  }
  func.func @transform_1(%arg0: i32) -> (i32, i32) {
    %c0_i32 = arith.constant 0 : i32
    %c0_i32_0 = arith.constant 0 : i32
    %c0_i32_1 = arith.constant 0 : i32
    return %c0_i32, %c0_i32_0 : i32, i32
  }
  func.func @transform_2(%arg0: i32) -> (i32, i32) {
    %c0_i32 = arith.constant 0 : i32
    %c0_i32_0 = arith.constant 0 : i32
    %c0_i32_1 = arith.constant 0 : i32
    return %c0_i32, %c0_i32_0 : i32, i32
  }
  func.func @transform_3(%arg0: i32) -> (i32, i32) {
    %c0_i32 = arith.constant 0 : i32
    %c0_i32_0 = arith.constant 0 : i32
    %c0_i32_1 = arith.constant 0 : i32
    return %c0_i32, %c0_i32_0 : i32, i32
  }
  func.func @transform_4(%arg0: i32) -> (i32, i32) {
    %c0_i32 = arith.constant 0 : i32
    %c0_i32_0 = arith.constant 0 : i32
    %c0_i32_1 = arith.constant 0 : i32
    return %c0_i32, %c0_i32_0 : i32, i32
  }
  func.func @transform_5(%arg0: i32) -> (i32, i32) {
    %c0_i32 = arith.constant 0 : i32
    %c0_i32_0 = arith.constant 0 : i32
    %c0_i32_1 = arith.constant 0 : i32
    return %c0_i32, %c0_i32_0 : i32, i32
  }
  func.func @transform_6(%arg0: i32) -> (i32, i32) {
    %c0_i32 = arith.constant 0 : i32
    %c0_i32_0 = arith.constant 0 : i32
    %c0_i32_1 = arith.constant 0 : i32
    return %c0_i32, %c0_i32_0 : i32, i32
  }
  func.func @transform_7(%arg0: i32) -> (i32, i32) {
    %c0_i32 = arith.constant 0 : i32
    %c0_i32_0 = arith.constant 0 : i32
    %c0_i32_1 = arith.constant 0 : i32
    return %c0_i32, %c0_i32_0 : i32, i32
  }
  func.func @transform_8(%arg0: i32) -> (i32, i32) {
    %c0_i32 = arith.constant 0 : i32
    %c0_i32_0 = arith.constant 0 : i32
    %c0_i32_1 = arith.constant 0 : i32
    return %c0_i32, %c0_i32_0 : i32, i32
  }
  func.func @transform_9(%arg0: i32) -> (i32, i32) {
    %c0_i32 = arith.constant 0 : i32
    %c0_i32_0 = arith.constant 0 : i32
    return %arg0, %c0_i32 : i32, i32
  }
}

</mosaic_0001>

<llo_original>
// kernel: msci_forward.1
$region0: #{msci_forward.1}
  #allocation0 [shape = 'u32[]', space=smem, size = 0x4, offset = 0x4, fixed_abs, tag = 'smem constant byte address 0x4 - core index']
  #allocation1 [shape = 'u32[72,128]{1,0:T(1,128)}', space=vmem, size = 0x9000, scoped, tag = 'internal scratch']
  %s0 = inlined_call_operand.vmem [shape: bf16[16,32], index: 0, kind: input, shape index: {}]
  %s1 = inlined_call_operand.vmem [shape: bf16[32,512], index: 1, kind: input, shape index: {}]
  %s2 = inlined_call_operand.vmem [shape: f32[1,512], index: 2, kind: input, shape index: {}]
  %s3 = inlined_call_operand.vmem [shape: bf16[512,256], index: 3, kind: input, shape index: {}]
  %s4 = inlined_call_operand.vmem [shape: f32[1,256], index: 4, kind: input, shape index: {}]
  %s5 = inlined_call_operand.vmem [shape: bf16[256,128], index: 5, kind: input, shape index: {}]
  %s6 = inlined_call_operand.vmem [shape: f32[1,128], index: 6, kind: input, shape index: {}]
  %s7 = inlined_call_operand.vmem [shape: bf16[128,128], index: 7, kind: input, shape index: {}]
  %s8 = inlined_call_operand.vmem [shape: f32[1,128], index: 8, kind: input, shape index: {}]
  %s9 = inlined_call_operand.vmem [shape: f32[16,128], index: 9, kind: output, shape index: {}]
  %s10 = sld [smem:[#allocation0]]
  $region46: #{msci_forward.1} parent=0
    _
  %s12 = ssub.s32 1, %s10
  %s13 = scalar_select 0, %s12, %s10
  // Predicated region
  $region2: #{msci_forward.1} parent=0 // pred_check
    _
  $region3: #{msci_forward.1} parent=0 // pred_check_branch
    %15 = sbr.rel (0) target = $region5
  $region4: #{msci_forward.1} parent=0 // pred_region
    _
  $region5: #{msci_forward.1} parent=0 // pred_fallthru
    _
  // Predicated region
  $region6: #{msci_forward.1} parent=0 // pred_check
    _
  $region7: #{msci_forward.1} parent=0 // pred_check_branch
    %17 = sbr.rel (0) target = $region9
  $region8: #{msci_forward.1} parent=0 // pred_region
    _
  $region9: #{msci_forward.1} parent=0 // pred_fallthru
    _
  // Predicated region
  $region10: #{msci_forward.1} parent=0 // pred_check
    _
  $region11: #{msci_forward.1} parent=0 // pred_check_branch
    %19 = sbr.rel (0) target = $region13
  $region12: #{msci_forward.1} parent=0 // pred_region
    _
  $region13: #{msci_forward.1} parent=0 // pred_fallthru
    _
  // Predicated region
  $region14: #{msci_forward.1} parent=0 // pred_check
    _
  $region15: #{msci_forward.1} parent=0 // pred_check_branch
    %21 = sbr.rel (0) target = $region17
  $region16: #{msci_forward.1} parent=0 // pred_region
    _
  $region17: #{msci_forward.1} parent=0 // pred_fallthru
    _
  // Predicated region
  $region18: #{msci_forward.1} parent=0 // pred_check
    _
  $region19: #{msci_forward.1} parent=0 // pred_check_branch
    %23 = sbr.rel (0) target = $region21
  $region20: #{msci_forward.1} parent=0 // pred_region
    _
  $region21: #{msci_forward.1} parent=0 // pred_fallthru
    _
  // Predicated region
  $region22: #{msci_forward.1} parent=0 // pred_check
    _
  $region23: #{msci_forward.1} parent=0 // pred_check_branch
    %25 = sbr.rel (0) target = $region25
  $region24: #{msci_forward.1} parent=0 // pred_region
    _
  $region25: #{msci_forward.1} parent=0 // pred_fallthru
    _
  // Predicated region
  $region26: #{msci_forward.1} parent=0 // pred_check
    _
  $region27: #{msci_forward.1} parent=0 // pred_check_branch
    %27 = sbr.rel (0) target = $region29
  $region28: #{msci_forward.1} parent=0 // pred_region
    _
  $region29: #{msci_forward.1} parent=0 // pred_fallthru
    _
  // Predicated region
  $region30: #{msci_forward.1} parent=0 // pred_check
    _
  $region31: #{msci_forward.1} parent=0 // pred_check_branch
    %29 = sbr.rel (0) target = $region33
  $region32: #{msci_forward.1} parent=0 // pred_region
    _
  $region33: #{msci_forward.1} parent=0 // pred_fallthru
    _
  // Predicated region
  $region34: #{msci_forward.1} parent=0 // pred_check
    _
  $region35: #{msci_forward.1} parent=0 // pred_check_branch
    %31 = sbr.rel (0) target = $region37
  $region36: #{msci_forward.1} parent=0 // pred_region
    _
  $region37: #{msci_forward.1} parent=0 // pred_fallthru
    _
  %v33 = vld [vmem:[%s0] sm:$0xf]
  %v34 = vld [vmem:[%s0 + $0x4] sm:$0xf]
  %v35 = vld [vmem:[%s1] sm:$0xff]
  %v36 = vld [vmem:[%s1 + $0x8] sm:$0xff]
  %v37 = vld [vmem:[%s1 + $0x10] sm:$0xff]
  %v38 = vld [vmem:[%s1 + $0x18] sm:$0xff]
  %v39 = vld [vmem:[%s1 + $0x20] sm:$0xff]
  %v40 = vld [vmem:[%s1 + $0x28] sm:$0xff]
  %v41 = vld [vmem:[%s1 + $0x30] sm:$0xff]
  %v42 = vld [vmem:[%s1 + $0x38] sm:$0xff]
  %v43 = vld [vmem:[%s2] sm:$0xf]
  %v45 = vperm.slane %v43, 0
  %v46 = vperm.slane %v43, 1
  %v47 = vperm.slane %v43, 2
  %v48 = vperm.slane %v43, 3
  %v55 = vunpack.c.l.b16 %v33
  %v56 = vunpack.c.l.b16 %v34
  %v57 = vpack.c.b16 %v56, %v55
  %v66 = vunpack.c.l.b16 %v35
  %v67 = vunpack.c.h.b16 %v35
  %v68 = vunpack.c.l.b16 %v36
  %v69 = vunpack.c.h.b16 %v36
  %v70 = vunpack.c.l.b16 %v37
  %v71 = vunpack.c.h.b16 %v37
  %v72 = vunpack.c.l.b16 %v38
  %v73 = vunpack.c.h.b16 %v38
  %v74 = vunpack.c.l.b16 %v39
  %v75 = vunpack.c.h.b16 %v39
  %v76 = vunpack.c.l.b16 %v40
  %v77 = vunpack.c.h.b16 %v40
  %v78 = vunpack.c.l.b16 %v41
  %v79 = vunpack.c.h.b16 %v41
  %v80 = vunpack.c.l.b16 %v42
  %v81 = vunpack.c.h.b16 %v42
  %v82 = vpack.c.b16 %v70, %v66
  %v83 = vpack.c.b16 %v71, %v67
  %v84 = vpack.c.b16 %v72, %v68
  %v85 = vpack.c.b16 %v73, %v69
  %v86 = vpack.c.b16 %v78, %v74
  %v87 = vpack.c.b16 %v79, %v75
  %v88 = vpack.c.b16 %v80, %v76
  %v89 = vpack.c.b16 %v81, %v77
  %vm98 = vcmask 261120
  %v100 = vsel %vm98, %v57, 0
  %102 = vmatpush.bf16.msra.mxu0 0
  %103 = vmatpush.bf16.msra.mxu0 0
  %104 = vmatpush.bf16.msra.mxu0 0
  %105 = vmatpush.bf16.msra.mxu0 0
  %106 = vmatpush.bf16.msra.mxu0 0
  %107 = vmatpush.bf16.msra.mxu0 0
  %108 = vmatpush.bf16.msra.mxu0 %v86
  %109 = vmatpush.bf16.msra.mxu0 %v82
  %110 = vmatmul.bf16.gmra.mxu0 %v100
  %v111 = vpop.f32.mrf.mxu0
  %v112 = vadd.f32 %v45, %v111
  %v113 = vpop.f32.mrf.mxu0
  %v114 = vadd.f32 %v45, %v113
  %115 = vdwg.mxu0
  %116 = vmatpush.bf16.msra.mxu0 0
  %117 = vmatpush.bf16.msra.mxu0 0
  %118 = vmatpush.bf16.msra.mxu0 0
  %119 = vmatpush.bf16.msra.mxu0 0
  %120 = vmatpush.bf16.msra.mxu0 0
  %121 = vmatpush.bf16.msra.mxu0 0
  %122 = vmatpush.bf16.msra.mxu0 %v87
  %123 = vmatpush.bf16.msra.mxu0 %v83
  %124 = vmatmul.bf16.gmra.mxu0 %v100
  %v125 = vpop.f32.mrf.mxu0
  %v126 = vadd.f32 %v46, %v125
  %v127 = vpop.f32.mrf.mxu0
  %v128 = vadd.f32 %v46, %v127
  %129 = vdwg.mxu0
  %130 = vmatpush.bf16.msra.mxu0 0
  %131 = vmatpush.bf16.msra.mxu0 0
  %132 = vmatpush.bf16.msra.mxu0 0
  %133 = vmatpush.bf16.msra.mxu0 0
  %134 = vmatpush.bf16.msra.mxu0 0
  %135 = vmatpush.bf16.msra.mxu0 0
  %136 = vmatpush.bf16.msra.mxu0 %v88
  %137 = vmatpush.bf16.msra.mxu0 %v84
  %138 = vmatmul.bf16.gmra.mxu0 %v100
  %v139 = vpop.f32.mrf.mxu0
  %v140 = vadd.f32 %v47, %v139
  %v141 = vpop.f32.mrf.mxu0
  %v142 = vadd.f32 %v47, %v141
  %143 = vdwg.mxu0
  %144 = vmatpush.bf16.msra.mxu0 0
  %145 = vmatpush.bf16.msra.mxu0 0
  %146 = vmatpush.bf16.msra.mxu0 0
  %147 = vmatpush.bf16.msra.mxu0 0
  %148 = vmatpush.bf16.msra.mxu0 0
  %149 = vmatpush.bf16.msra.mxu0 0
  %150 = vmatpush.bf16.msra.mxu0 %v89
  %151 = vmatpush.bf16.msra.mxu0 %v85
  %152 = vmatmul.bf16.gmra.mxu0 %v100
  %v153 = vpop.f32.mrf.mxu0
  %v154 = vadd.f32 %v48, %v153
  %v155 = vpop.f32.mrf.mxu0
  %v156 = vadd.f32 %v48, %v155
  %157 = vdwg.mxu0
  %v158 = vmax.f32 %v112, 0.0
  %v159 = vmax.f32 %v126, 0.0
  %v160 = vmax.f32 %v140, 0.0
  %v161 = vmax.f32 %v154, 0.0
  %v162 = vmax.f32 %v114, 0.0
  %v163 = vmax.f32 %v128, 0.0
  %v164 = vmax.f32 %v142, 0.0
  %v165 = vmax.f32 %v156, 0.0
  %v166 = vpack.c.bf16 %v162, %v158
  %v167 = vpack.c.bf16 %v163, %v159
  %v168 = vpack.c.bf16 %v164, %v160
  %v169 = vpack.c.bf16 %v165, %v161
  %v170 = vld [vmem:[%s3] sm:$0xff]
  %v171 = vld [vmem:[%s3 + $0x8] sm:$0xff]
  %v172 = vld [vmem:[%s3 + $0x10] sm:$0xff]
  %v173 = vld [vmem:[%s3 + $0x18] sm:$0xff]
  %v174 = vld [vmem:[%s3 + $0x20] sm:$0xff]
  %v175 = vld [vmem:[%s3 + $0x28] sm:$0xff]
  %v176 = vld [vmem:[%s3 + $0x30] sm:$0xff]
  %v177 = vld [vmem:[%s3 + $0x38] sm:$0xff]
  %v178 = vld [vmem:[%s3 + $0x40] sm:$0xff]
  %v179 = vld [vmem:[%s3 + $0x48] sm:$0xff]
  %v180 = vld [vmem:[%s3 + $0x50] sm:$0xff]
  %v181 = vld [vmem:[%s3 + $0x58] sm:$0xff]
  %v182 = vld [vmem:[%s3 + $0x60] sm:$0xff]
  %v183 = vld [vmem:[%s3 + $0x68] sm:$0xff]
  %v184 = vld [vmem:[%s3 + $0x70] sm:$0xff]
  %v185 = vld [vmem:[%s3 + $0x78] sm:$0xff]
  %v186 = vld [vmem:[%s3 + $0x80] sm:$0xff]
  %v187 = vld [vmem:[%s3 + $0x88] sm:$0xff]
  %v188 = vld [vmem:[%s3 + $0x90] sm:$0xff]
  %v189 = vld [vmem:[%s3 + $0x98] sm:$0xff]
  %v190 = vld [vmem:[%s3 + $0xa0] sm:$0xff]
  %v191 = vld [vmem:[%s3 + $0xa8] sm:$0xff]
  %v192 = vld [vmem:[%s3 + $0xb0] sm:$0xff]
  %v193 = vld [vmem:[%s3 + $0xb8] sm:$0xff]
  %v194 = vld [vmem:[%s3 + $0xc0] sm:$0xff]
  %v195 = vld [vmem:[%s3 + $0xc8] sm:$0xff]
  %v196 = vld [vmem:[%s3 + $0xd0] sm:$0xff]
  %v197 = vld [vmem:[%s3 + $0xd8] sm:$0xff]
  %v198 = vld [vmem:[%s3 + $0xe0] sm:$0xff]
  %v199 = vld [vmem:[%s3 + $0xe8] sm:$0xff]
  %v200 = vld [vmem:[%s3 + $0xf0] sm:$0xff]
  %v201 = vld [vmem:[%s3 + $0xf8] sm:$0xff]
  %v202 = vld [vmem:[%s3 + $0x100] sm:$0xff]
  %v203 = vld [vmem:[%s3 + $0x108] sm:$0xff]
  %v204 = vld [vmem:[%s3 + $0x110] sm:$0xff]
  %v205 = vld [vmem:[%s3 + $0x118] sm:$0xff]
  %v206 = vld [vmem:[%s3 + $0x120] sm:$0xff]
  %v207 = vld [vmem:[%s3 + $0x128] sm:$0xff]
  %v208 = vld [vmem:[%s3 + $0x130] sm:$0xff]
  %v209 = vld [vmem:[%s3 + $0x138] sm:$0xff]
  %v210 = vld [vmem:[%s3 + $0x140] sm:$0xff]
  %v211 = vld [vmem:[%s3 + $0x148] sm:$0xff]
  %v212 = vld [vmem:[%s3 + $0x150] sm:$0xff]
  %v213 = vld [vmem:[%s3 + $0x158] sm:$0xff]
  %v214 = vld [vmem:[%s3 + $0x160] sm:$0xff]
  %v215 = vld [vmem:[%s3 + $0x168] sm:$0xff]
  %v216 = vld [vmem:[%s3 + $0x170] sm:$0xff]
  %v217 = vld [vmem:[%s3 + $0x178] sm:$0xff]
  %v218 = vld [vmem:[%s3 + $0x180] sm:$0xff]
  %v219 = vld [vmem:[%s3 + $0x188] sm:$0xff]
  %v220 = vld [vmem:[%s3 + $0x190] sm:$0xff]
  %v221 = vld [vmem:[%s3 + $0x198] sm:$0xff]
  %v222 = vld [vmem:[%s3 + $0x1a0] sm:$0xff]
  %v223 = vld [vmem:[%s3 + $0x1a8] sm:$0xff]
  %v224 = vld [vmem:[%s3 + $0x1b0] sm:$0xff]
  %v225 = vld [vmem:[%s3 + $0x1b8] sm:$0xff]
  %v226 = vld [vmem:[%s3 + $0x1c0] sm:$0xff]
  %v227 = vld [vmem:[%s3 + $0x1c8] sm:$0xff]
  %v228 = vld [vmem:[%s3 + $0x1d0] sm:$0xff]
  %v229 = vld [vmem:[%s3 + $0x1d8] sm:$0xff]
  %v230 = vld [vmem:[%s3 + $0x1e0] sm:$0xff]
  %v231 = vld [vmem:[%s3 + $0x1e8] sm:$0xff]
  %v232 = vld [vmem:[%s3 + $0x1f0] sm:$0xff]
  %v233 = vld [vmem:[%s3 + $0x1f8] sm:$0xff]
  %v234 = vld [vmem:[%s4] sm:$0x3]
  %v236 = vperm.slane %v234, 0
  %v237 = vperm.slane %v234, 1
  %v304 = vunpack.c.l.b16 %v170
  %v305 = vunpack.c.h.b16 %v170
  %v306 = vunpack.c.l.b16 %v171
  %v307 = vunpack.c.h.b16 %v171
  %v308 = vunpack.c.l.b16 %v172
  %v309 = vunpack.c.h.b16 %v172
  %v310 = vunpack.c.l.b16 %v173
  %v311 = vunpack.c.h.b16 %v173
  %v312 = vunpack.c.l.b16 %v174
  %v313 = vunpack.c.h.b16 %v174
  %v314 = vunpack.c.l.b16 %v175
  %v315 = vunpack.c.h.b16 %v175
  %v316 = vunpack.c.l.b16 %v176
  %v317 = vunpack.c.h.b16 %v176
  %v318 = vunpack.c.l.b16 %v177
  %v319 = vunpack.c.h.b16 %v177
  %v320 = vunpack.c.l.b16 %v178
  %v321 = vunpack.c.h.b16 %v178
  %v322 = vunpack.c.l.b16 %v179
  %v323 = vunpack.c.h.b16 %v179
  %v324 = vunpack.c.l.b16 %v180
  %v325 = vunpack.c.h.b16 %v180
  %v326 = vunpack.c.l.b16 %v181
  %v327 = vunpack.c.h.b16 %v181
  %v328 = vunpack.c.l.b16 %v182
  %v329 = vunpack.c.h.b16 %v182
  %v330 = vunpack.c.l.b16 %v183
  %v331 = vunpack.c.h.b16 %v183
  %v332 = vunpack.c.l.b16 %v184
  %v333 = vunpack.c.h.b16 %v184
  %v334 = vunpack.c.l.b16 %v185
  %v335 = vunpack.c.h.b16 %v185
  %v336 = vunpack.c.l.b16 %v186
  %v337 = vunpack.c.h.b16 %v186
  %v338 = vunpack.c.l.b16 %v187
  %v339 = vunpack.c.h.b16 %v187
  %v340 = vunpack.c.l.b16 %v188
  %v341 = vunpack.c.h.b16 %v188
  %v342 = vunpack.c.l.b16 %v189
  %v343 = vunpack.c.h.b16 %v189
  %v344 = vunpack.c.l.b16 %v190
  %v345 = vunpack.c.h.b16 %v190
  %v346 = vunpack.c.l.b16 %v191
  %v347 = vunpack.c.h.b16 %v191
  %v348 = vunpack.c.l.b16 %v192
  %v349 = vunpack.c.h.b16 %v192
  %v350 = vunpack.c.l.b16 %v193
  %v351 = vunpack.c.h.b16 %v193
  %v352 = vunpack.c.l.b16 %v194
  %v353 = vunpack.c.h.b16 %v194
  %v354 = vunpack.c.l.b16 %v195
  %v355 = vunpack.c.h.b16 %v195
  %v356 = vunpack.c.l.b16 %v196
  %v357 = vunpack.c.h.b16 %v196
  %v358 = vunpack.c.l.b16 %v197
  %v359 = vunpack.c.h.b16 %v197
  %v360 = vunpack.c.l.b16 %v198
  %v361 = vunpack.c.h.b16 %v198
  %v362 = vunpack.c.l.b16 %v199
  %v363 = vunpack.c.h.b16 %v199
  %v364 = vunpack.c.l.b16 %v200
  %v365 = vunpack.c.h.b16 %v200
  %v366 = vunpack.c.l.b16 %v201
  %v367 = vunpack.c.h.b16 %v201
  %v368 = vunpack.c.l.b16 %v202
  %v369 = vunpack.c.h.b16 %v202
  %v370 = vunpack.c.l.b16 %v203
  %v371 = vunpack.c.h.b16 %v203
  %v372 = vunpack.c.l.b16 %v204
  %v373 = vunpack.c.h.b16 %v204
  %v374 = vunpack.c.l.b16 %v205
  %v375 = vunpack.c.h.b16 %v205
  %v376 = vunpack.c.l.b16 %v206
  %v377 = vunpack.c.h.b16 %v206
  %v378 = vunpack.c.l.b16 %v207
  %v379 = vunpack.c.h.b16 %v207
  %v380 = vunpack.c.l.b16 %v208
  %v381 = vunpack.c.h.b16 %v208
  %v382 = vunpack.c.l.b16 %v209
  %v383 = vunpack.c.h.b16 %v209
  %v384 = vunpack.c.l.b16 %v210
  %v385 = vunpack.c.h.b16 %v210
  %v386 = vunpack.c.l.b16 %v211
  %v387 = vunpack.c.h.b16 %v211
  %v388 = vunpack.c.l.b16 %v212
  %v389 = vunpack.c.h.b16 %v212
  %v390 = vunpack.c.l.b16 %v213
  %v391 = vunpack.c.h.b16 %v213
  %v392 = vunpack.c.l.b16 %v214
  %v393 = vunpack.c.h.b16 %v214
  %v394 = vunpack.c.l.b16 %v215
  %v395 = vunpack.c.h.b16 %v215
  %v396 = vunpack.c.l.b16 %v216
  %v397 = vunpack.c.h.b16 %v216
  %v398 = vunpack.c.l.b16 %v217
  %v399 = vunpack.c.h.b16 %v217
  %v400 = vunpack.c.l.b16 %v218
  %v401 = vunpack.c.h.b16 %v218
  %v402 = vunpack.c.l.b16 %v219
  %v403 = vunpack.c.h.b16 %v219
  %v404 = vunpack.c.l.b16 %v220
  %v405 = vunpack.c.h.b16 %v220
  %v406 = vunpack.c.l.b16 %v221
  %v407 = vunpack.c.h.b16 %v221
  %v408 = vunpack.c.l.b16 %v222
  %v409 = vunpack.c.h.b16 %v222
  %v410 = vunpack.c.l.b16 %v223
  %v411 = vunpack.c.h.b16 %v223
  %v412 = vunpack.c.l.b16 %v224
  %v413 = vunpack.c.h.b16 %v224
  %v414 = vunpack.c.l.b16 %v225
  %v415 = vunpack.c.h.b16 %v225
  %v416 = vunpack.c.l.b16 %v226
  %v417 = vunpack.c.h.b16 %v226
  %v418 = vunpack.c.l.b16 %v227
  %v419 = vunpack.c.h.b16 %v227
  %v420 = vunpack.c.l.b16 %v228
  %v421 = vunpack.c.h.b16 %v228
  %v422 = vunpack.c.l.b16 %v229
  %v423 = vunpack.c.h.b16 %v229
  %v424 = vunpack.c.l.b16 %v230
  %v425 = vunpack.c.h.b16 %v230
  %v426 = vunpack.c.l.b16 %v231
  %v427 = vunpack.c.h.b16 %v231
  %v428 = vunpack.c.l.b16 %v232
  %v429 = vunpack.c.h.b16 %v232
  %v430 = vunpack.c.l.b16 %v233
  %v431 = vunpack.c.h.b16 %v233
  %v432 = vpack.c.b16 %v306, %v304
  %v433 = vpack.c.b16 %v307, %v305
  %v434 = vpack.c.b16 %v310, %v308
  %v435 = vpack.c.b16 %v311, %v309
  %v436 = vpack.c.b16 %v314, %v312
  %v437 = vpack.c.b16 %v315, %v313
  %v438 = vpack.c.b16 %v318, %v316
  %v439 = vpack.c.b16 %v319, %v317
  %v440 = vpack.c.b16 %v322, %v320
  %v441 = vpack.c.b16 %v323, %v321
  %v442 = vpack.c.b16 %v326, %v324
  %v443 = vpack.c.b16 %v327, %v325
  %v444 = vpack.c.b16 %v330, %v328
  %v445 = vpack.c.b16 %v331, %v329
  %v446 = vpack.c.b16 %v334, %v332
  %v447 = vpack.c.b16 %v335, %v333
  %v448 = vpack.c.b16 %v338, %v336
  %v449 = vpack.c.b16 %v339, %v337
  %v450 = vpack.c.b16 %v342, %v340
  %v451 = vpack.c.b16 %v343, %v341
  %v452 = vpack.c.b16 %v346, %v344
  %v453 = vpack.c.b16 %v347, %v345
  %v454 = vpack.c.b16 %v350, %v348
  %v455 = vpack.c.b16 %v351, %v349
  %v456 = vpack.c.b16 %v354, %v352
  %v457 = vpack.c.b16 %v355, %v353
  %v458 = vpack.c.b16 %v358, %v356
  %v459 = vpack.c.b16 %v359, %v357
  %v460 = vpack.c.b16 %v362, %v360
  %v461 = vpack.c.b16 %v363, %v361
  %v462 = vpack.c.b16 %v366, %v364
  %v463 = vpack.c.b16 %v367, %v365
  %v464 = vpack.c.b16 %v370, %v368
  %v465 = vpack.c.b16 %v371, %v369
  %v466 = vpack.c.b16 %v374, %v372
  %v467 = vpack.c.b16 %v375, %v373
  %v468 = vpack.c.b16 %v378, %v376
  %v469 = vpack.c.b16 %v379, %v377
  %v470 = vpack.c.b16 %v382, %v380
  %v471 = vpack.c.b16 %v383, %v381
  %v472 = vpack.c.b16 %v386, %v384
  %v473 = vpack.c.b16 %v387, %v385
  %v474 = vpack.c.b16 %v390, %v388
  %v475 = vpack.c.b16 %v391, %v389
  %v476 = vpack.c.b16 %v394, %v392
  %v477 = vpack.c.b16 %v395, %v393
  %v478 = vpack.c.b16 %v398, %v396
  %v479 = vpack.c.b16 %v399, %v397
  %v480 = vpack.c.b16 %v402, %v400
  %v481 = vpack.c.b16 %v403, %v401
  %v482 = vpack.c.b16 %v406, %v404
  %v483 = vpack.c.b16 %v407, %v405
  %v484 = vpack.c.b16 %v410, %v408
  %v485 = vpack.c.b16 %v411, %v409
  %v486 = vpack.c.b16 %v414, %v412
  %v487 = vpack.c.b16 %v415, %v413
  %v488 = vpack.c.b16 %v418, %v416
  %v489 = vpack.c.b16 %v419, %v417
  %v490 = vpack.c.b16 %v422, %v420
  %v491 = vpack.c.b16 %v423, %v421
  %v492 = vpack.c.b16 %v426, %v424
  %v493 = vpack.c.b16 %v427, %v425
  %v494 = vpack.c.b16 %v430, %v428
  %v495 = vpack.c.b16 %v431, %v429
  %560 = vmatpush.bf16.msra.mxu0 %v446
  %561 = vmatpush.bf16.msra.mxu0 %v444
  %562 = vmatpush.bf16.msra.mxu0 %v442
  %563 = vmatpush.bf16.msra.mxu0 %v440
  %564 = vmatpush.bf16.msra.mxu0 %v438
  %565 = vmatpush.bf16.msra.mxu0 %v436
  %566 = vmatpush.bf16.msra.mxu0 %v434
  %567 = vmatpush.bf16.msra.mxu0 %v432
  %568 = vmatmul.bf16.gmra.mxu0 %v166
  %v569 = vpop.f32.mrf.mxu0
  %v570 = vadd.f32 %v236, %v569
  %v571 = vpop.f32.mrf.mxu0
  %v572 = vadd.f32 %v236, %v571
  %573 = vdwg.mxu0
  %574 = vmatpush.bf16.msra.mxu0 %v462
  %575 = vmatpush.bf16.msra.mxu0 %v460
  %576 = vmatpush.bf16.msra.mxu0 %v458
  %577 = vmatpush.bf16.msra.mxu0 %v456
  %578 = vmatpush.bf16.msra.mxu0 %v454
  %579 = vmatpush.bf16.msra.mxu0 %v452
  %580 = vmatpush.bf16.msra.mxu0 %v450
  %581 = vmatpush.bf16.msra.mxu0 %v448
  %582 = vmatmul.bf16.gmra.mxu0 %v167
  %v583 = vpop.f32.mrf.mxu0
  %v584 = vadd.f32 %v570, %v583
  %v585 = vpop.f32.mrf.mxu0
  %v586 = vadd.f32 %v572, %v585
  %587 = vdwg.mxu0
  %588 = vmatpush.bf16.msra.mxu0 %v478
  %589 = vmatpush.bf16.msra.mxu0 %v476
  %590 = vmatpush.bf16.msra.mxu0 %v474
  %591 = vmatpush.bf16.msra.mxu0 %v472
  %592 = vmatpush.bf16.msra.mxu0 %v470
  %593 = vmatpush.bf16.msra.mxu0 %v468
  %594 = vmatpush.bf16.msra.mxu0 %v466
  %595 = vmatpush.bf16.msra.mxu0 %v464
  %596 = vmatmul.bf16.gmra.mxu0 %v168
  %v597 = vpop.f32.mrf.mxu0
  %v598 = vadd.f32 %v584, %v597
  %v599 = vpop.f32.mrf.mxu0
  %v600 = vadd.f32 %v586, %v599
  %601 = vdwg.mxu0
  %602 = vmatpush.bf16.msra.mxu0 %v494
  %603 = vmatpush.bf16.msra.mxu0 %v492
  %604 = vmatpush.bf16.msra.mxu0 %v490
  %605 = vmatpush.bf16.msra.mxu0 %v488
  %606 = vmatpush.bf16.msra.mxu0 %v486
  %607 = vmatpush.bf16.msra.mxu0 %v484
  %608 = vmatpush.bf16.msra.mxu0 %v482
  %609 = vmatpush.bf16.msra.mxu0 %v480
  %610 = vmatmul.bf16.gmra.mxu0 %v169
  %v611 = vpop.f32.mrf.mxu0
  %v612 = vadd.f32 %v598, %v611
  %v613 = vpop.f32.mrf.mxu0
  %v614 = vadd.f32 %v600, %v613
  %615 = vdwg.mxu0
  %616 = vmatpush.bf16.msra.mxu0 %v447
  %617 = vmatpush.bf16.msra.mxu0 %v445
  %618 = vmatpush.bf16.msra.mxu0 %v443
  %619 = vmatpush.bf16.msra.mxu0 %v441
  %620 = vmatpush.bf16.msra.mxu0 %v439
  %621 = vmatpush.bf16.msra.mxu0 %v437
  %622 = vmatpush.bf16.msra.mxu0 %v435
  %623 = vmatpush.bf16.msra.mxu0 %v433
  %624 = vmatmul.bf16.gmra.mxu0 %v166
  %v625 = vpop.f32.mrf.mxu0
  %v626 = vadd.f32 %v237, %v625
  %v627 = vpop.f32.mrf.mxu0
  %v628 = vadd.f32 %v237, %v627
  %629 = vdwg.mxu0
  %630 = vmatpush.bf16.msra.mxu0 %v463
  %631 = vmatpush.bf16.msra.mxu0 %v461
  %632 = vmatpush.bf16.msra.mxu0 %v459
  %633 = vmatpush.bf16.msra.mxu0 %v457
  %634 = vmatpush.bf16.msra.mxu0 %v455
  %635 = vmatpush.bf16.msra.mxu0 %v453
  %636 = vmatpush.bf16.msra.mxu0 %v451
  %637 = vmatpush.bf16.msra.mxu0 %v449
  %638 = vmatmul.bf16.gmra.mxu0 %v167
  %v639 = vpop.f32.mrf.mxu0
  %v640 = vadd.f32 %v626, %v639
  %v641 = vpop.f32.mrf.mxu0
  %v642 = vadd.f32 %v628, %v641
  %643 = vdwg.mxu0
  %644 = vmatpush.bf16.msra.mxu0 %v479
  %645 = vmatpush.bf16.msra.mxu0 %v477
  %646 = vmatpush.bf16.msra.mxu0 %v475
  %647 = vmatpush.bf16.msra.mxu0 %v473
  %648 = vmatpush.bf16.msra.mxu0 %v471
  %649 = vmatpush.bf16.msra.mxu0 %v469
  %650 = vmatpush.bf16.msra.mxu0 %v467
  %651 = vmatpush.bf16.msra.mxu0 %v465
  %652 = vmatmul.bf16.gmra.mxu0 %v168
  %v653 = vpop.f32.mrf.mxu0
  %v654 = vadd.f32 %v640, %v653
  %v655 = vpop.f32.mrf.mxu0
  %v656 = vadd.f32 %v642, %v655
  %657 = vdwg.mxu0
  %658 = vmatpush.bf16.msra.mxu0 %v495
  %659 = vmatpush.bf16.msra.mxu0 %v493
  %660 = vmatpush.bf16.msra.mxu0 %v491
  %661 = vmatpush.bf16.msra.mxu0 %v489
  %662 = vmatpush.bf16.msra.mxu0 %v487
  %663 = vmatpush.bf16.msra.mxu0 %v485
  %664 = vmatpush.bf16.msra.mxu0 %v483
  %665 = vmatpush.bf16.msra.mxu0 %v481
  %666 = vmatmul.bf16.gmra.mxu0 %v169
  %v667 = vpop.f32.mrf.mxu0
  %v668 = vadd.f32 %v654, %v667
  %v669 = vpop.f32.mrf.mxu0
  %v670 = vadd.f32 %v656, %v669
  %671 = vdwg.mxu0
  %v672 = vmax.f32 %v612, 0.0
  %v673 = vmax.f32 %v668, 0.0
  %v674 = vmax.f32 %v614, 0.0
  %v675 = vmax.f32 %v670, 0.0
  %v676 = vpack.c.bf16 %v674, %v672
  %v677 = vpack.c.bf16 %v675, %v673
  %v678 = vld [vmem:[%s5] sm:$0xf]
  %v679 = vld [vmem:[%s5 + $0x4] sm:$0xf]
  %v680 = vld [vmem:[%s5 + $0x8] sm:$0xf]
  %v681 = vld [vmem:[%s5 + $0xc] sm:$0xf]
  %v682 = vld [vmem:[%s5 + $0x10] sm:$0xf]
  %v683 = vld [vmem:[%s5 + $0x14] sm:$0xf]
  %v684 = vld [vmem:[%s5 + $0x18] sm:$0xf]
  %v685 = vld [vmem:[%s5 + $0x1c] sm:$0xf]
  %v686 = vld [vmem:[%s5 + $0x20] sm:$0xf]
  %v687 = vld [vmem:[%s5 + $0x24] sm:$0xf]
  %v688 = vld [vmem:[%s5 + $0x28] sm:$0xf]
  %v689 = vld [vmem:[%s5 + $0x2c] sm:$0xf]
  %v690 = vld [vmem:[%s5 + $0x30] sm:$0xf]
  %v691 = vld [vmem:[%s5 + $0x34] sm:$0xf]
  %v692 = vld [vmem:[%s5 + $0x38] sm:$0xf]
  %v693 = vld [vmem:[%s5 + $0x3c] sm:$0xf]
  %v694 = vld [vmem:[%s5 + $0x40] sm:$0xf]
  %v695 = vld [vmem:[%s5 + $0x44] sm:$0xf]
  %v696 = vld [vmem:[%s5 + $0x48] sm:$0xf]
  %v697 = vld [vmem:[%s5 + $0x4c] sm:$0xf]
  %v698 = vld [vmem:[%s5 + $0x50] sm:$0xf]
  %v699 = vld [vmem:[%s5 + $0x54] sm:$0xf]
  %v700 = vld [vmem:[%s5 + $0x58] sm:$0xf]
  %v701 = vld [vmem:[%s5 + $0x5c] sm:$0xf]
  %v702 = vld [vmem:[%s5 + $0x60] sm:$0xf]
  %v703 = vld [vmem:[%s5 + $0x64] sm:$0xf]
  %v704 = vld [vmem:[%s5 + $0x68] sm:$0xf]
  %v705 = vld [vmem:[%s5 + $0x6c] sm:$0xf]
  %v706 = vld [vmem:[%s5 + $0x70] sm:$0xf]
  %v707 = vld [vmem:[%s5 + $0x74] sm:$0xf]
  %v708 = vld [vmem:[%s5 + $0x78] sm:$0xf]
  %v709 = vld [vmem:[%s5 + $0x7c] sm:$0xf]
  %v710 = vld [vmem:[%s6] sm:$0x1]
  %v712 = vperm.slane %v710, 0
  %v746 = vunpack.c.l.b16 %v678
  %v747 = vunpack.c.l.b16 %v679
  %v748 = vunpack.c.l.b16 %v680
  %v749 = vunpack.c.l.b16 %v681
  %v750 = vunpack.c.l.b16 %v682
  %v751 = vunpack.c.l.b16 %v683
  %v752 = vunpack.c.l.b16 %v684
  %v753 = vunpack.c.l.b16 %v685
  %v754 = vunpack.c.l.b16 %v686
  %v755 = vunpack.c.l.b16 %v687
  %v756 = vunpack.c.l.b16 %v688
  %v757 = vunpack.c.l.b16 %v689
  %v758 = vunpack.c.l.b16 %v690
  %v759 = vunpack.c.l.b16 %v691
  %v760 = vunpack.c.l.b16 %v692
  %v761 = vunpack.c.l.b16 %v693
  %v762 = vunpack.c.l.b16 %v694
  %v763 = vunpack.c.l.b16 %v695
  %v764 = vunpack.c.l.b16 %v696
  %v765 = vunpack.c.l.b16 %v697
  %v766 = vunpack.c.l.b16 %v698
  %v767 = vunpack.c.l.b16 %v699
  %v768 = vunpack.c.l.b16 %v700
  %v769 = vunpack.c.l.b16 %v701
  %v770 = vunpack.c.l.b16 %v702
  %v771 = vunpack.c.l.b16 %v703
  %v772 = vunpack.c.l.b16 %v704
  %v773 = vunpack.c.l.b16 %v705
  %v774 = vunpack.c.l.b16 %v706
  %v775 = vunpack.c.l.b16 %v707
  %v776 = vunpack.c.l.b16 %v708
  %v777 = vunpack.c.l.b16 %v709
  %v778 = vpack.c.b16 %v747, %v746
  %v779 = vpack.c.b16 %v749, %v748
  %v780 = vpack.c.b16 %v751, %v750
  %v781 = vpack.c.b16 %v753, %v752
  %v782 = vpack.c.b16 %v755, %v754
  %v783 = vpack.c.b16 %v757, %v756
  %v784 = vpack.c.b16 %v759, %v758
  %v785 = vpack.c.b16 %v761, %v760
  %v786 = vpack.c.b16 %v763, %v762
  %v787 = vpack.c.b16 %v765, %v764
  %v788 = vpack.c.b16 %v767, %v766
  %v789 = vpack.c.b16 %v769, %v768
  %v790 = vpack.c.b16 %v771, %v770
  %v791 = vpack.c.b16 %v773, %v772
  %v792 = vpack.c.b16 %v775, %v774
  %v793 = vpack.c.b16 %v777, %v776
  %810 = vmatpush.bf16.msra.mxu0 %v785
  %811 = vmatpush.bf16.msra.mxu0 %v784
  %812 = vmatpush.bf16.msra.mxu0 %v783
  %813 = vmatpush.bf16.msra.mxu0 %v782
  %814 = vmatpush.bf16.msra.mxu0 %v781
  %815 = vmatpush.bf16.msra.mxu0 %v780
  %816 = vmatpush.bf16.msra.mxu0 %v779
  %817 = vmatpush.bf16.msra.mxu0 %v778
  %818 = vmatmul.bf16.gmra.mxu0 %v676
  %v819 = vpop.f32.mrf.mxu0
  %v820 = vadd.f32 %v712, %v819
  %v821 = vpop.f32.mrf.mxu0
  %v822 = vadd.f32 %v712, %v821
  %823 = vdwg.mxu0
  %824 = vmatpush.bf16.msra.mxu0 %v793
  %825 = vmatpush.bf16.msra.mxu0 %v792
  %826 = vmatpush.bf16.msra.mxu0 %v791
  %827 = vmatpush.bf16.msra.mxu0 %v790
  %828 = vmatpush.bf16.msra.mxu0 %v789
  %829 = vmatpush.bf16.msra.mxu0 %v788
  %830 = vmatpush.bf16.msra.mxu0 %v787
  %831 = vmatpush.bf16.msra.mxu0 %v786
  %832 = vmatmul.bf16.gmra.mxu0 %v677
  %v833 = vpop.f32.mrf.mxu0
  %v834 = vadd.f32 %v820, %v833
  %v835 = vpop.f32.mrf.mxu0
  %v836 = vadd.f32 %v822, %v835
  %837 = vdwg.mxu0
  %v838 = vmax.f32 %v834, 0.0
  %v839 = vmax.f32 %v836, 0.0
  %v840 = vpack.c.bf16 %v839, %v838
  %v841 = vld [vmem:[%s7] sm:$0xf]
  %v842 = vld [vmem:[%s7 + $0x4] sm:$0xf]
  %v843 = vld [vmem:[%s7 + $0x8] sm:$0xf]
  %v844 = vld [vmem:[%s7 + $0xc] sm:$0xf]
  %v845 = vld [vmem:[%s7 + $0x10] sm:$0xf]
  %v846 = vld [vmem:[%s7 + $0x14] sm:$0xf]
  %v847 = vld [vmem:[%s7 + $0x18] sm:$0xf]
  %v848 = vld [vmem:[%s7 + $0x1c] sm:$0xf]
  %v849 = vld [vmem:[%s7 + $0x20] sm:$0xf]
  %v850 = vld [vmem:[%s7 + $0x24] sm:$0xf]
  %v851 = vld [vmem:[%s7 + $0x28] sm:$0xf]
  %v852 = vld [vmem:[%s7 + $0x2c] sm:$0xf]
  %v853 = vld [vmem:[%s7 + $0x30] sm:$0xf]
  %v854 = vld [vmem:[%s7 + $0x34] sm:$0xf]
  %v855 = vld [vmem:[%s7 + $0x38] sm:$0xf]
  %v856 = vld [vmem:[%s7 + $0x3c] sm:$0xf]
  %v857 = vld [vmem:[%s8] sm:$0x1]
  %v859 = vperm.slane %v857, 0
  %v877 = vunpack.c.l.b16 %v841
  %v878 = vunpack.c.l.b16 %v842
  %v879 = vunpack.c.l.b16 %v843
  %v880 = vunpack.c.l.b16 %v844
  %v881 = vunpack.c.l.b16 %v845
  %v882 = vunpack.c.l.b16 %v846
  %v883 = vunpack.c.l.b16 %v847
  %v884 = vunpack.c.l.b16 %v848
  %v885 = vunpack.c.l.b16 %v849
  %v886 = vunpack.c.l.b16 %v850
  %v887 = vunpack.c.l.b16 %v851
  %v888 = vunpack.c.l.b16 %v852
  %v889 = vunpack.c.l.b16 %v853
  %v890 = vunpack.c.l.b16 %v854
  %v891 = vunpack.c.l.b16 %v855
  %v892 = vunpack.c.l.b16 %v856
  %v893 = vpack.c.b16 %v878, %v877
  %v894 = vpack.c.b16 %v880, %v879
  %v895 = vpack.c.b16 %v882, %v881
  %v896 = vpack.c.b16 %v884, %v883
  %v897 = vpack.c.b16 %v886, %v885
  %v898 = vpack.c.b16 %v888, %v887
  %v899 = vpack.c.b16 %v890, %v889
  %v900 = vpack.c.b16 %v892, %v891
  %909 = vmatpush.bf16.msra.mxu0 %v900
  %910 = vmatpush.bf16.msra.mxu0 %v899
  %911 = vmatpush.bf16.msra.mxu0 %v898
  %912 = vmatpush.bf16.msra.mxu0 %v897
  %913 = vmatpush.bf16.msra.mxu0 %v896
  %914 = vmatpush.bf16.msra.mxu0 %v895
  %915 = vmatpush.bf16.msra.mxu0 %v894
  %916 = vmatpush.bf16.msra.mxu0 %v893
  %917 = vmatmul.bf16.gmra.mxu0 %v840
  %v918 = vpop.f32.mrf.mxu0
  %v919 = vadd.f32 %v859, %v918
  %v920 = vpop.f32.mrf.mxu0
  %v921 = vadd.f32 %v859, %v920
  %922 = vdwg.mxu0
  %vm923 = vcmp.gt.f32.partialorder %v919, 20.0
  %vm924 = vcmp.gt.f32.partialorder %v921, 20.0
  %v925 = vmin.f32 %v919, 20.0
  %v926 = vmin.f32 %v921, 20.0
  %v927 = vmul.f32 %v925, 1.442695
  %v928 = vpow.pop %v927
  %v929 = vmul.f32 %v926, 1.442695
  %v930 = vpow.pop %v929
  %v931 = vadd.f32 %v928, 1.0
  %v932 = vlog2.pop %v931
  %v933 = vmul.f32 %v932, 0.6931472
  %v934 = vmul.f32 -0.5, %v928
  %v935 = vadd.f32 %v934, 1.0
  %v936 = vmul.f32 %v935, %v928
  %v937 = vand.u32 2147483647, %v928
  %vm938 = vcmp.lt.f32.partialorder %v937, 0.0004427343
  %v939 = vsel %vm938, %v936, %v933
  %v940 = vadd.f32 %v930, 1.0
  %v941 = vlog2.pop %v940
  %v942 = vmul.f32 %v941, 0.6931472
  %v943 = vmul.f32 -0.5, %v930
  %v944 = vadd.f32 %v943, 1.0
  %v945 = vmul.f32 %v944, %v930
  %v946 = vand.u32 2147483647, %v930
  %vm947 = vcmp.lt.f32.partialorder %v946, 0.0004427343
  %v948 = vsel %vm947, %v945, %v942
  %v949 = vsel %vm923, %v919, %v939
  %v950 = vsel %vm924, %v921, %v948
  %951 = vst [vmem:[%s9] sm:$0xff] %v949
  %952 = vst [vmem:[%s9 + $0x8] sm:$0xff] %v950
  // Predicated region
  $region38: #{msci_forward.1} parent=0 // pred_check
    _
  $region39: #{msci_forward.1} parent=0 // pred_check_branch
    %954 = sbr.rel (0) target = $region41
  $region40: #{msci_forward.1} parent=0 // pred_region
    _
  $region41: #{msci_forward.1} parent=0 // pred_fallthru
    _
  // Predicated region
  $region42: #{msci_forward.1} parent=0 // pred_check
    _
  $region43: #{msci_forward.1} parent=0 // pred_check_branch
    %956 = sbr.rel (0) target = $region45
  $region44: #{msci_forward.1} parent=0 // pred_region
    _
  $region45: #{msci_forward.1} parent=0 // pred_fallthru
    _

</llo_original>
